<compile_context>
chip_gen: v5e
topology: v5e:2x2
jax: 0.10.0
libtpu: 0.0.40
codegen_flags: <defaults>
</compile_context>

<pallas_src>
import jax
import jax.numpy as jnp
from jax.experimental import pallas as pl
from jax.experimental.pallas import tpu as pltpu

LANE = 128      # vreg lane width (last dim)
SUBLANE = 8     # f32 sublane count (second-to-last dim)

_VMEM_BUDGET_BYTES = 48 * 1024 * 1024  # conservative: leaves headroom on v7x's 64 MiB VMEM
_VMEM_LIMIT_CAP = 56 * 1024 * 1024     # never request more than any generation can serve


def _round_up(n: int, m: int) -> int:
    return ((n + m - 1) // m) * m


def _cdiv(a: int, b: int) -> int:
    return (a + b - 1) // b


def mlp_kernel(x_ref, w1_ref, b1_ref, w2_ref, b2_ref, o_ref):
    """Fused Linear -> ReLU -> (Dropout=identity) -> Linear on one batch tile."""
    # f32 -> bf16 cast inside the kernel (VPU); x arrives unpadded from HBM.
    x = x_ref[...].astype(jnp.bfloat16)
    # Layer 1: bf16 matmul on the MXU, f32 accumulation.
    h = jnp.dot(x, w1_ref[...], preferred_element_type=jnp.float32)
    # Bias add + ReLU in f32 on the VPU.
    h = jnp.maximum(h + b1_ref[...], 0.0)
    # Dropout(p) in eval mode == identity.
    # Layer 2: cast activations back to bf16 for native MXU rate, accumulate in f32.
    out = jnp.dot(h.astype(w2_ref.dtype), w2_ref[...],
                  preferred_element_type=jnp.float32)
    o_ref[...] = (out + b2_ref[...]).astype(o_ref.dtype)


def prepare_mlp_params(w1, b1, w2, b2):
    """Pad (lane-dense) + bf16-cast the weights ONCE at model-load time.

    w1: (input_dim, hidden), w2: (hidden, output) -- transposed vs torch nn.Linear
    storage.  Only feature dims that become matmul lane dims are padded to 128;
    x's feature dim stays unpadded so activations need no wrapper copy.
    Zero padding is numerically exact (padded hidden columns are exactly 0 after ReLU).
    """
    input_dim, hidden_dim = w1.shape
    output_dim = w2.shape[1]
    hid_p = _round_up(hidden_dim, LANE)
    out_p = _round_up(output_dim, LANE)

    w1_p = jnp.zeros((input_dim, hid_p), jnp.bfloat16).at[:, :hidden_dim].set(
        w1.astype(jnp.bfloat16))
    b1_p = jnp.zeros((1, hid_p), jnp.float32).at[0, :hidden_dim].set(
        b1.astype(jnp.float32))
    w2_p = jnp.zeros((hid_p, out_p), jnp.bfloat16).at[:hidden_dim, :output_dim].set(
        w2.astype(jnp.bfloat16))
    b2_p = jnp.zeros((1, out_p), jnp.float32).at[0, :output_dim].set(
        b2.astype(jnp.float32))
    return {"w1": w1_p, "b1": b1_p, "w2": w2_p, "b2": b2_p,
            "input_dim": input_dim, "output_dim": output_dim}


def _vmem_bytes_needed(tb, input_dim, hid_p, out_p, weight_buffers=1):
    in_lanes = _round_up(input_dim, LANE)          # VMEM lane padding of the x tile
    weights = weight_buffers * (input_dim * hid_p * 2 + hid_p * out_p * 2
                                + (hid_p + out_p) * 4)
    x_tiles = 2 * tb * in_lanes * 4                # double-buffered f32 x tile
    out_tiles = 2 * tb * out_p * 4                 # double-buffered f32 logits tile
    scratch = tb * in_lanes * 2 + tb * hid_p * (4 + 2)   # bf16 x, f32 h, bf16 h
    return weights + x_tiles + out_tiles + scratch


def _clamp_batch_tile(tb, input_dim, hid_p, out_p):
    while tb > SUBLANE and _vmem_bytes_needed(tb, input_dim, hid_p, out_p) > _VMEM_BUDGET_BYTES:
        tb = max(SUBLANE, _round_up(tb // 2, SUBLANE))
    return tb


def _vmem_limit(need_bytes):
    # Explicit limit (covers v5e's 16 MiB scoped default) with headroom, capped below
    # every generation's physical VMEM.
    return int(min(max(need_bytes * 5 // 4 + (4 << 20), 32 << 20), _VMEM_LIMIT_CAP))


def _tiled_call(x, w1_p, b1_p, w2_p, b2_p, *, tb, num_tiles, out_p, cost,
                vmem_limit, single_buffer_weights):
    input_dim = x.shape[1]
    hid_p = w1_p.shape[1]
    wmode = {"pipeline_mode": pl.Buffered(1)} if single_buffer_weights else {}
    in_specs = [
        # x unpadded: last block dim equals the full array dim -> legal, no wrapper pad.
        pl.BlockSpec((tb, input_dim), lambda i: (i, 0)),
        # Weights/biases stay VMEM-resident across the whole grid.
        pl.BlockSpec((input_dim, hid_p), lambda i: (0, 0), **wmode),
        pl.BlockSpec((1, hid_p), lambda i: (0, 0), **wmode),
        pl.BlockSpec((hid_p, out_p), lambda i: (0, 0), **wmode),
        pl.BlockSpec((1, out_p), lambda i: (0, 0), **wmode),
    ]
    return pl.pallas_call(
        mlp_kernel,
        out_shape=jax.ShapeDtypeStruct((x.shape[0], out_p), jnp.float32),
        grid=(num_tiles,),
        in_specs=in_specs,
        out_specs=pl.BlockSpec((tb, out_p), lambda i: (i, 0)),
        compiler_params=pltpu.CompilerParams(
            # Independent batch tiles -> shard across v7x's two TensorCores.
            dimension_semantics=("parallel",),
            vmem_limit_bytes=vmem_limit,
        ),
        cost_estimate=cost,
    )(x, w1_p, b1_p, w2_p, b2_p)


def mlp_classifier_forward_prepared(x, params, *, batch_tile=1024, slice_output=True):
    """x: (B, input_dim) f32 (or bf16). params: output of prepare_mlp_params.
    Returns f32 logits (B, output_dim), or the padded (B, out_p) slab if
    slice_output=False (lets the caller fuse softmax/argmax and skip a slice pass)."""
    B, input_dim = x.shape
    assert params["input_dim"] == input_dim, "x feature dim does not match prepared params"
    w1_p, b1_p, w2_p, b2_p = params["w1"], params["b1"], params["w2"], params["b2"]
    output_dim = params["output_dim"]
    hid_p = w1_p.shape[1]
    out_p = w2_p.shape[1]

    cost = pl.CostEstimate(
        flops=2 * B * (input_dim * hid_p + hid_p * out_p),
        transcendentals=0,
        bytes_accessed=(x.size * x.dtype.itemsize
                        + w1_p.size * 2 + w2_p.size * 2
                        + b1_p.size * 4 + b2_p.size * 4
                        + B * out_p * 4),
    )

    if B <= batch_tile:
        # Whole problem is VMEM-resident in one un-gridded call: no pipeline machinery.
        need = _vmem_bytes_needed(max(B, SUBLANE), input_dim, hid_p, out_p)
        logits_p = pl.pallas_call(
            mlp_kernel,
            out_shape=jax.ShapeDtypeStruct((B, out_p), jnp.float32),
            compiler_params=pltpu.CompilerParams(vmem_limit_bytes=_vmem_limit(need)),
            cost_estimate=cost,
        )(x, w1_p, b1_p, w2_p, b2_p)
    else:
        # v7x: keep >= 2 batch tiles so ("parallel",) can shard across both TensorCores.
        tb = min(batch_tile, _round_up(_cdiv(B, 2), SUBLANE))
        # Clamp the tile to the VMEM budget (v7x has only 64 MiB physical VMEM).
        tb = _clamp_batch_tile(tb, input_dim, hid_p, out_p)
        num_tiles = _cdiv(B, tb)  # partial last tile: OOB reads unused, OOB writes dropped
        vmem_limit = _vmem_limit(_vmem_bytes_needed(tb, input_dim, hid_p, out_p))
        try:
            logits_p = _tiled_call(x, w1_p, b1_p, w2_p, b2_p, tb=tb,
                                   num_tiles=num_tiles, out_p=out_p, cost=cost,
                                   vmem_limit=vmem_limit, single_buffer_weights=True)
        except Exception:
            # Fallback if pipeline_mode=pl.Buffered(1) is unsupported on this jax build.
            logits_p = _tiled_call(x, w1_p, b1_p, w2_p, b2_p, tb=tb,
                                   num_tiles=num_tiles, out_p=out_p, cost=cost,
                                   vmem_limit=vmem_limit, single_buffer_weights=False)

    if slice_output:
        return logits_p[:, :output_dim]
    return logits_p


def mlp_classifier_forward(x, w1, b1, w2, b2, **kwargs):
    """Convenience wrapper (pads weights per call). Prefer prepare_mlp_params + *_prepared
    in a serving loop so weight padding is hoisted out of the hot path."""
    return mlp_classifier_forward_prepared(x, prepare_mlp_params(w1, b1, w2, b2), **kwargs)


def reference_forward_f32(x, w1, b1, w2, b2):
    h = jnp.maximum(x @ w1 + b1, 0.0)
    return h @ w2 + b2


def reference_forward_bf16(x, w1, b1, w2, b2):
    # Mirrors the kernel numerics: bf16 matmul operands, f32 accumulation,
    # f32 bias add + ReLU.
    h = jnp.dot(x.astype(jnp.bfloat16), w1.astype(jnp.bfloat16),
                preferred_element_type=jnp.float32)
    h = jnp.maximum(h + b1, 0.0)
    out = jnp.dot(h.astype(jnp.bfloat16), w2.astype(jnp.bfloat16),
                  preferred_element_type=jnp.float32)
    return out + b2


if __name__ == "__main__":
    batch = 8
    input_dim = 32
    hidden_dim = 64
    output_dim = 16
    dropout_rate = 0.1  # noqa: F841  (identity in eval mode)

    key = jax.random.PRNGKey(0)
    kx, kw1, kb1, kw2, kb2, kx2, kx3 = jax.random.split(key, 7)

    bound1 = 1.0 / (input_dim ** 0.5)
    bound2 = 1.0 / (hidden_dim ** 0.5)
    x = jax.random.normal(kx, (batch, input_dim), dtype=jnp.float32)
    w1 = jax.random.uniform(kw1, (input_dim, hidden_dim), jnp.float32, -bound1, bound1)
    b1 = jax.random.uniform(kb1, (hidden_dim,), jnp.float32, -bound1, bound1)
    w2 = jax.random.uniform(kw2, (hidden_dim, output_dim), jnp.float32, -bound2, bound2)
    b2 = jax.random.uniform(kb2, (output_dim,), jnp.float32, -bound2, bound2)

    # Pad/cast the weights ONCE (model-load time); forward calls only move x and logits.
    params = jax.tree_util.tree_map(jax.block_until_ready,
                                    prepare_mlp_params(w1, b1, w2, b2))

    # 1) Tiny batch: single un-gridded, whole-problem-in-VMEM call.
    out = jax.block_until_ready(mlp_classifier_forward_prepared(x, params))
    assert out.shape == (batch, output_dim)
    ref_bf16 = reference_forward_bf16(x, w1, b1, w2, b2)
    ref_f32 = reference_forward_f32(x, w1, b1, w2, b2)
    assert jnp.allclose(out, ref_bf16, atol=2e-3, rtol=2e-3), "mismatch vs bf16 reference"
    assert jnp.allclose(out, ref_f32, atol=1e-1, rtol=1e-1), "mismatch vs f32 reference"

    # 2) Large batch, tile-divisible: batch-tiled, megacore-parallel grid path.
    big_batch = 4096
    xb = jax.random.normal(kx2, (big_batch, input_dim), dtype=jnp.float32)
    out_big = jax.block_until_ready(mlp_classifier_forward_prepared(xb, params))
    assert out_big.shape == (big_batch, output_dim)
    assert jnp.allclose(out_big, reference_forward_bf16(xb, w1, b1, w2, b2),
                        atol=2e-3, rtol=2e-3), "mismatch (tiled path)"

    # 3) Ragged batch: partial last tile (masked writeback), still no x padding pass.
    ragged_batch = 2500
    xr = jax.random.normal(kx3, (ragged_batch, input_dim), dtype=jnp.float32)
    out_r = jax.block_until_ready(mlp_classifier_forward_prepared(xr, params))
    assert out_r.shape == (ragged_batch, output_dim)
    assert jnp.allclose(out_r, reference_forward_bf16(xr, w1, b1, w2, b2),
                        atol=2e-3, rtol=2e-3), "mismatch (ragged tiled path)"

    # Sanity: caller-facing padded slab option (skips the feature-slice pass).
    out_pad = jax.block_until_ready(
        mlp_classifier_forward_prepared(x, params, slice_output=False))
    assert out_pad.shape == (batch, params["w2"].shape[1])

    print("KERNEL_OK")
</pallas_src>

<mosaic_0001>
module attributes {stable_mosaic.version = 11 : i64} {
  func.func @mlp_kernel(%arg0: memref<8x32xf32, #tpu.memory_space<vmem>>, %arg1: memref<32x128xbf16, #tpu.memory_space<vmem>>, %arg2: memref<1x128xf32, #tpu.memory_space<vmem>>, %arg3: memref<128x128xbf16, #tpu.memory_space<vmem>>, %arg4: memref<1x128xf32, #tpu.memory_space<vmem>>, %arg5: memref<8x128xf32, #tpu.memory_space<vmem>>) attributes {dimension_semantics = [], scalar_prefetch = 0 : i64, scratch_operands = 0 : i64, tpu.core_type = #tpu.core_type<tc>} {
    %c0 = arith.constant 0 : index
    %c0_0 = arith.constant 0 : index
    %0 = vector.load %arg0[%c0, %c0_0] : memref<8x32xf32, #tpu.memory_space<vmem>>, vector<8x32xf32>
    %1 = arith.truncf %0 : vector<8x32xf32> to vector<8x32xbf16>
    %c0_1 = arith.constant 0 : index
    %c0_2 = arith.constant 0 : index
    %2 = vector.load %arg1[%c0_1, %c0_2] : memref<32x128xbf16, #tpu.memory_space<vmem>>, vector<32x128xbf16>
    %cst = arith.constant dense<0.000000e+00> : vector<8x128xf32>
    %3 = tpu.matmul %1, %2, %cst {dimension_numbers = #tpu.dot_dimension_numbers<[1], [0], [0], [1], [0, 0, 1, 1], [], []>} : vector<8x32xbf16>, vector<32x128xbf16>, vector<8x128xf32> -> vector<8x128xf32>
    %c0_3 = arith.constant 0 : index
    %c0_4 = arith.constant 0 : index
    %4 = vector.load %arg2[%c0_3, %c0_4] : memref<1x128xf32, #tpu.memory_space<vmem>>, vector<1x128xf32>
    %5 = vector.broadcast %4 : vector<1x128xf32> to vector<8x128xf32>
    %6 = arith.addf %3, %5 : vector<8x128xf32>
    %cst_5 = arith.constant 0.000000e+00 : f32
    %7 = vector.broadcast %cst_5 : f32 to vector<8x128xf32>
    %8 = arith.maximumf %6, %7 : vector<8x128xf32>
    %9 = arith.truncf %8 : vector<8x128xf32> to vector<8x128xbf16>
    %c0_6 = arith.constant 0 : index
    %c0_7 = arith.constant 0 : index
    %10 = vector.load %arg3[%c0_6, %c0_7] : memref<128x128xbf16, #tpu.memory_space<vmem>>, vector<128x128xbf16>
    %cst_8 = arith.constant dense<0.000000e+00> : vector<8x128xf32>
    %11 = tpu.matmul %9, %10, %cst_8 {dimension_numbers = #tpu.dot_dimension_numbers<[1], [0], [0], [1], [0, 0, 1, 1], [], []>} : vector<8x128xbf16>, vector<128x128xbf16>, vector<8x128xf32> -> vector<8x128xf32>
    %c0_9 = arith.constant 0 : index
    %c0_10 = arith.constant 0 : index
    %12 = vector.load %arg4[%c0_9, %c0_10] : memref<1x128xf32, #tpu.memory_space<vmem>>, vector<1x128xf32>
    %13 = vector.broadcast %12 : vector<1x128xf32> to vector<8x128xf32>
    %14 = arith.addf %11, %13 : vector<8x128xf32>
    %c0_11 = arith.constant 0 : index
    %c0_12 = arith.constant 0 : index
    %15 = vector.load %arg5[%c0_11, %c0_12] : memref<8x128xf32, #tpu.memory_space<vmem>>, vector<8x128xf32>
    tpu.vector_store %arg5[%c0_11, %c0_12], %14 {strides = array<i32>} : memref<8x128xf32, #tpu.memory_space<vmem>>, vector<8x128xf32>,
    return
  }
}

</mosaic_0001>

<llo_original>
// kernel: tpu_custom_call.1
$region0: #{tpu_custom_call.1}
  #allocation0 [shape = 'u32[]', space=smem, size = 0x4, offset = 0x4, fixed_abs, tag = 'smem constant byte address 0x4 - core index']
  #allocation1 [shape = 'u32[72,128]{1,0:T(1,128)}', space=vmem, size = 0x9000, scoped, tag = 'internal scratch']
  %s0 = inlined_call_operand.hbm [shape: f32[8,32], index: 0, kind: input, shape index: {}]
  %s1 = inlined_call_operand.hbm [shape: bf16[32,128], index: 1, kind: input, shape index: {}]
  %s2 = inlined_call_operand.vmem [shape: f32[1,128], index: 2, kind: input, shape index: {}]
  %s3 = inlined_call_operand.hbm [shape: bf16[128,128], index: 3, kind: input, shape index: {}]
  %s4 = inlined_call_operand.vmem [shape: f32[1,128], index: 4, kind: input, shape index: {}]
  %s5 = inlined_call_operand.hbm [shape: f32[8,128], index: 5, kind: output, shape index: {}]
  %s6 = sld [smem:[#allocation0]]
  $region42: #{tpu_custom_call.1} parent=0
    _
  %s8 = ssub.s32 1, %s6
  %s9 = scalar_select 0, %s8, %s6
  $region1: #{tpu_custom_call.1} parent=0
    #allocation2 [shape = 'u8[4096]{0}', space=vmem, size = 0x1000, scoped, tag = 'input window, operand 0, single buffered']
    #allocation3 [shape = 's32[1]{0}', space=sflag, size = 0x4, scoped, tag = 'scoped memory for tpu_custom_call.1']
    #allocation4 [shape = 's32[1]{0}', space=sflag, size = 0x4, scoped, tag = 'scoped memory for tpu_custom_call.1']
    #allocation5 [shape = 'u8[8192]{0}', space=vmem, size = 0x2000, scoped, tag = 'input window, operand 1, single buffered']
    #allocation6 [shape = 's32[1]{0}', space=sflag, size = 0x4, scoped, tag = 'scoped memory for tpu_custom_call.1']
    #allocation7 [shape = 'u8[32768]{0}', space=vmem, size = 0x8000, scoped, tag = 'input window, operand 3, single buffered']
    #allocation8 [shape = 'u8[4096]{0}', space=vmem, size = 0x1000, scoped, tag = 'output window, operand 0, single buffered']
    %10 = vsyncpa [#allocation3], 0
    %11 = vsyncpa [#allocation6], 0
    %12 = vsyncpa [#allocation4], 0
    // Predicated region
    $region2: #{tpu_custom_call.1} parent=1 // pred_check
      _
    $region3: #{tpu_custom_call.1} parent=1 // pred_check_branch
      %14 = sbr.rel (0) target = $region5
    $region4: #{tpu_custom_call.1} parent=1 // pred_region
      %16 = vsyncadd [#allocation3], 0
      %s18 = sshll.u32 %s0, 4
      %s19 = int_to_ptr.hbm [resolvable:$true] %s18
      %s20 = sshll.u32 [#allocation2], 4
      %s21 = int_to_ptr.vmem [resolvable:$true] %s20
      %23 = dma.hbm_to_vmem [thread:$0]  %s19, 128, %s21, [#allocation3]
    $region5: #{tpu_custom_call.1} parent=1 // pred_fallthru
      _
    // Predicated region
    $region6: #{tpu_custom_call.1} parent=1 // pred_check
      _
    $region7: #{tpu_custom_call.1} parent=1 // pred_check_branch
      %25 = sbr.rel (0) target = $region9
    $region8: #{tpu_custom_call.1} parent=1 // pred_region
      %27 = vsyncadd [#allocation6], 0
      %s28 = sshll.u32 %s1, 4
      %s29 = int_to_ptr.hbm [resolvable:$true] %s28
      %s30 = sshll.u32 [#allocation5], 4
      %s31 = int_to_ptr.vmem [resolvable:$true] %s30
      %36 = dma.hbm_to_vmem [thread:$0]  %s29, 256, %s31, [#allocation6], 64, 64, 4
    $region9: #{tpu_custom_call.1} parent=1 // pred_fallthru
      _
    // Predicated region
    $region10: #{tpu_custom_call.1} parent=1 // pred_check
      _
    $region11: #{tpu_custom_call.1} parent=1 // pred_check_branch
      %38 = sbr.rel (0) target = $region13
    $region12: #{tpu_custom_call.1} parent=1 // pred_region
      _
    $region13: #{tpu_custom_call.1} parent=1 // pred_fallthru
      _
    // Predicated region
    $region14: #{tpu_custom_call.1} parent=1 // pred_check
      _
    $region15: #{tpu_custom_call.1} parent=1 // pred_check_branch
      %40 = sbr.rel (0) target = $region17
    $region16: #{tpu_custom_call.1} parent=1 // pred_region
      %42 = vsyncadd [#allocation6], 0
      %s43 = sshll.u32 %s3, 4
      %s44 = int_to_ptr.hbm [resolvable:$true] %s43
      %s45 = sshll.u32 [#allocation7], 4
      %s46 = int_to_ptr.vmem [resolvable:$true] %s45
      %51 = dma.hbm_to_vmem [thread:$0]  %s44, 1024, %s46, [#allocation6], 64, 64, 4
    $region17: #{tpu_custom_call.1} parent=1 // pred_fallthru
      _
    // Predicated region
    $region18: #{tpu_custom_call.1} parent=1 // pred_check
      _
    $region19: #{tpu_custom_call.1} parent=1 // pred_check_branch
      %53 = sbr.rel (0) target = $region21
    $region20: #{tpu_custom_call.1} parent=1 // pred_region
      _
    $region21: #{tpu_custom_call.1} parent=1 // pred_fallthru
      _
    // Predicated region
    $region22: #{tpu_custom_call.1} parent=1 // pred_check
      _
    $region23: #{tpu_custom_call.1} parent=1 // pred_check_branch
      %55 = sbr.rel (0) target = $region25
    $region24: #{tpu_custom_call.1} parent=1 // pred_region
      %57 = dma.done [#allocation3], 128
    $region25: #{tpu_custom_call.1} parent=1 // pred_fallthru
      _
    // Predicated region
    $region26: #{tpu_custom_call.1} parent=1 // pred_check
      _
    $region27: #{tpu_custom_call.1} parent=1 // pred_check_branch
      %59 = sbr.rel (0) target = $region29
    $region28: #{tpu_custom_call.1} parent=1 // pred_region
      %61 = dma.done [#allocation6], 256
    $region29: #{tpu_custom_call.1} parent=1 // pred_fallthru
      _
    // Predicated region
    $region30: #{tpu_custom_call.1} parent=1 // pred_check
      _
    $region31: #{tpu_custom_call.1} parent=1 // pred_check_branch
      %63 = sbr.rel (0) target = $region33
    $region32: #{tpu_custom_call.1} parent=1 // pred_region
      %65 = dma.done [#allocation6], 1024
    $region33: #{tpu_custom_call.1} parent=1 // pred_fallthru
      _
    %v67 = vld [vmem:[#allocation2] sm:$0xff]
    %v68 = vpack.c.bf16 %v67, %v67
    %v69 = vld [vmem:[#allocation5] sm:$0xf]
    %v70 = vld [vmem:[#allocation5 + $0x4] sm:$0xf]
    %v71 = vld [vmem:[#allocation5 + $0x8] sm:$0xf]
    %v72 = vld [vmem:[#allocation5 + $0xc] sm:$0xf]
    %v73 = vld [vmem:[%s2] sm:$0x1]
    %v75 = vperm.slane %v73, 0
    %v81 = vunpack.c.l.b16 %v69
    %v82 = vunpack.c.l.b16 %v70
    %v83 = vunpack.c.l.b16 %v71
    %v84 = vunpack.c.l.b16 %v72
    %v85 = vpack.c.b16 %v82, %v81
    %v86 = vpack.c.b16 %v84, %v83
    %vm89 = vcmask 261120
    %v91 = vsel %vm89, %v68, 0
    %93 = vmatpush.bf16.msra.mxu0 0
    %94 = vmatpush.bf16.msra.mxu0 0
    %95 = vmatpush.bf16.msra.mxu0 0
    %96 = vmatpush.bf16.msra.mxu0 0
    %97 = vmatpush.bf16.msra.mxu0 0
    %98 = vmatpush.bf16.msra.mxu0 0
    %99 = vmatpush.bf16.msra.mxu0 %v86
    %100 = vmatpush.bf16.msra.mxu0 %v85
    %101 = vmatmul.bf16.gmra.mxu0 %v91
    %v102 = vpop.f32.mrf.mxu0
    %v103 = vadd.f32 %v75, %v102
    %v104 = vpop.f32.mrf.mxu0
    %105 = vdwg.mxu0
    %v106 = vmax.f32 %v103, 0.0
    %v107 = vpack.c.bf16 %v106, %v106
    %v108 = vld [vmem:[#allocation7] sm:$0xf]
    %v109 = vld [vmem:[#allocation7 + $0x4] sm:$0xf]
    %v110 = vld [vmem:[#allocation7 + $0x8] sm:$0xf]
    %v111 = vld [vmem:[#allocation7 + $0xc] sm:$0xf]
    %v112 = vld [vmem:[#allocation7 + $0x10] sm:$0xf]
    %v113 = vld [vmem:[#allocation7 + $0x14] sm:$0xf]
    %v114 = vld [vmem:[#allocation7 + $0x18] sm:$0xf]
    %v115 = vld [vmem:[#allocation7 + $0x1c] sm:$0xf]
    %v116 = vld [vmem:[#allocation7 + $0x20] sm:$0xf]
    %v117 = vld [vmem:[#allocation7 + $0x24] sm:$0xf]
    %v118 = vld [vmem:[#allocation7 + $0x28] sm:$0xf]
    %v119 = vld [vmem:[#allocation7 + $0x2c] sm:$0xf]
    %v120 = vld [vmem:[#allocation7 + $0x30] sm:$0xf]
    %v121 = vld [vmem:[#allocation7 + $0x34] sm:$0xf]
    %v122 = vld [vmem:[#allocation7 + $0x38] sm:$0xf]
    %v123 = vld [vmem:[#allocation7 + $0x3c] sm:$0xf]
    %v124 = vld [vmem:[%s4] sm:$0x1]
    %v126 = vperm.slane %v124, 0
    %v144 = vunpack.c.l.b16 %v108
    %v145 = vunpack.c.l.b16 %v109
    %v146 = vunpack.c.l.b16 %v110
    %v147 = vunpack.c.l.b16 %v111
    %v148 = vunpack.c.l.b16 %v112
    %v149 = vunpack.c.l.b16 %v113
    %v150 = vunpack.c.l.b16 %v114
    %v151 = vunpack.c.l.b16 %v115
    %v152 = vunpack.c.l.b16 %v116
    %v153 = vunpack.c.l.b16 %v117
    %v154 = vunpack.c.l.b16 %v118
    %v155 = vunpack.c.l.b16 %v119
    %v156 = vunpack.c.l.b16 %v120
    %v157 = vunpack.c.l.b16 %v121
    %v158 = vunpack.c.l.b16 %v122
    %v159 = vunpack.c.l.b16 %v123
    %v160 = vpack.c.b16 %v145, %v144
    %v161 = vpack.c.b16 %v147, %v146
    %v162 = vpack.c.b16 %v149, %v148
    %v163 = vpack.c.b16 %v151, %v150
    %v164 = vpack.c.b16 %v153, %v152
    %v165 = vpack.c.b16 %v155, %v154
    %v166 = vpack.c.b16 %v157, %v156
    %v167 = vpack.c.b16 %v159, %v158
    %176 = vmatpush.bf16.msra.mxu0 %v167
    %177 = vmatpush.bf16.msra.mxu0 %v166
    %178 = vmatpush.bf16.msra.mxu0 %v165
    %179 = vmatpush.bf16.msra.mxu0 %v164
    %180 = vmatpush.bf16.msra.mxu0 %v163
    %181 = vmatpush.bf16.msra.mxu0 %v162
    %182 = vmatpush.bf16.msra.mxu0 %v161
    %183 = vmatpush.bf16.msra.mxu0 %v160
    %184 = vmatmul.bf16.gmra.mxu0 %v107
    %v185 = vpop.f32.mrf.mxu0
    %v186 = vadd.f32 %v126, %v185
    %v187 = vpop.f32.mrf.mxu0
    %188 = vdwg.mxu0
    %189 = vst [vmem:[#allocation8] sm:$0xff] %v186
    // Predicated region
    $region34: #{tpu_custom_call.1} parent=1 // pred_check
      _
    $region35: #{tpu_custom_call.1} parent=1 // pred_check_branch
      %191 = sbr.rel (0) target = $region37
    $region36: #{tpu_custom_call.1} parent=1 // pred_region
      %193 = vsyncadd [#allocation4], 0
      %s195 = sshll.u32 [#allocation8], 4
      %s196 = int_to_ptr.vmem [resolvable:$true] %s195
      %s197 = sshll.u32 %s5, 4
      %s198 = int_to_ptr.hbm [resolvable:$true] %s197
      %200 = dma.vmem_to_hbm [thread:$0]  %s196, 128, %s198, [#allocation4]
    $region37: #{tpu_custom_call.1} parent=1 // pred_fallthru
      _
    // Predicated region
    $region38: #{tpu_custom_call.1} parent=1 // pred_check
      _
    $region39: #{tpu_custom_call.1} parent=1 // pred_check_branch
      %202 = sbr.rel (0) target = $region41
    $region40: #{tpu_custom_call.1} parent=1 // pred_region
      %204 = dma.done [#allocation4], 128
    $region41: #{tpu_custom_call.1} parent=1 // pred_fallthru
      _
    %205 = vsyncpa [#allocation3], 1
    %206 = vsyncpa [#allocation6], 1
    %207 = vsyncpa [#allocation4], 1

</llo_original>
